<compile_context>
chip_gen: v7x
topology: tpu7x:2x2x1
jax: 0.10.0
libtpu: 0.0.40
codegen_flags: <defaults>
</compile_context>

<pallas_src>
import functools
import math

import jax
import jax.numpy as jnp
from jax.experimental import pallas as pl
from jax.experimental.pallas import tpu as pltpu

_LANE = 128          # TPU lane width; pad feature dims to a multiple of this.
_DEFAULT_TM = 1024   # rows of B*S per grid step (multiple of 8). Fine on v5e/v6e/v7x
                     # at these feature sizes; halve if E/T grow large on v7x.


# ------------------------------ small helpers ------------------------------ #

def _pad_to(a, axis, mult):
    """Zero-pad `a` along `axis` up to the next multiple of `mult`."""
    pad = (-a.shape[axis]) % mult
    if pad == 0:
        return a
    widths = [(0, 0)] * a.ndim
    widths[axis] = (0, pad)
    return jnp.pad(a, widths)


def _pick_tm(m, tm):
    # Full-extent block when the whole M fits in one tile (no (8,128) divisibility
    # requirement in that case); otherwise a multiple-of-8 tile.
    if m <= tm:
        return m
    assert tm % 8 == 0
    return tm


# ------------------------------ Pallas kernels ----------------------------- #

def _linear_kernel(x_ref, w_ref, b_ref, o_ref):
    """o = x @ w + b.  x:(TM,K) bf16, w:(K,Np) bf16 (resident), b:(1,Np) f32."""
    acc = jnp.dot(x_ref[...], w_ref[...], preferred_element_type=jnp.float32)
    o_ref[...] = (acc + b_ref[...]).astype(o_ref.dtype)


def _make_fused_dec_kernel(compute_dtype):
    def kernel(x_ref, w1_ref, b1_ref, w2_ref, b2_ref, o_ref):
        """o = (x @ w1 + b1) @ w2 + b2, intermediate kept in VMEM/vregs (no HBM trip)."""
        h = jnp.dot(x_ref[...], w1_ref[...], preferred_element_type=jnp.float32)
        h = (h + b1_ref[...]).astype(compute_dtype)
        acc = jnp.dot(h, w2_ref[...], preferred_element_type=jnp.float32)
        o_ref[...] = (acc + b2_ref[...]).astype(o_ref.dtype)
    return kernel


# ------------------------------ kernel wrappers ----------------------------- #

def pallas_linear(x2d, w, b, *, tm=_DEFAULT_TM, compute_dtype=jnp.bfloat16):
    """y = x2d @ w + b.  x2d:(M,K) f32, w:(K,Np) compute_dtype (lane-padded),
    b:(1,Np) f32.  Returns (M,Np) f32.  Gridded over M; weights stay resident."""
    M, K = x2d.shape
    Kw, Np = w.shape
    assert K == Kw and b.shape == (1, Np)
    x2d = x2d.astype(compute_dtype)           # halve activation DMA bytes
    TM = _pick_tm(M, tm)
    grid = (pl.cdiv(M, TM),)
    return pl.pallas_call(
        _linear_kernel,
        out_shape=jax.ShapeDtypeStruct((M, Np), jnp.float32),
        grid_spec=pltpu.PrefetchScalarGridSpec(
            num_scalar_prefetch=0,
            grid=grid,
            in_specs=[
                pl.BlockSpec((TM, K), lambda i: (i, 0)),   # streamed activations
                pl.BlockSpec((K, Np), lambda i: (0, 0)),   # weight: resident in VMEM
                pl.BlockSpec((1, Np), lambda i: (0, 0)),   # bias:   resident in VMEM
            ],
            out_specs=pl.BlockSpec((TM, Np), lambda i: (i, 0)),
        ),
        compiler_params=pltpu.CompilerParams(
            dimension_semantics=("parallel",)),            # megacore / v7x 2-TC shard
    )(x2d, w, b)


def pallas_linear_fused(x2d, w1, b1, w2, b2, *, tm=_DEFAULT_TM,
                        compute_dtype=jnp.bfloat16):
    """y = (x2d @ w1 + b1) @ w2 + b2 in one kernel (decoder-embedding + output proj).
    x2d:(M,K) f32, w1:(K,Ep) bf16, b1:(1,Ep) f32, w2:(Ep,Tp) bf16, b2:(1,Tp) f32.
    Returns (M,Tp) f32.  The (M,Ep) intermediate never touches HBM."""
    M, K = x2d.shape
    Kw, Ep = w1.shape
    Ew, Tp = w2.shape
    assert K == Kw and Ep == Ew and b1.shape == (1, Ep) and b2.shape == (1, Tp)
    x2d = x2d.astype(compute_dtype)
    TM = _pick_tm(M, tm)
    grid = (pl.cdiv(M, TM),)
    return pl.pallas_call(
        _make_fused_dec_kernel(compute_dtype),
        out_shape=jax.ShapeDtypeStruct((M, Tp), jnp.float32),
        grid_spec=pltpu.PrefetchScalarGridSpec(
            num_scalar_prefetch=0,
            grid=grid,
            in_specs=[
                pl.BlockSpec((TM, K), lambda i: (i, 0)),   # streamed activations
                pl.BlockSpec((K, Ep), lambda i: (0, 0)),   # resident
                pl.BlockSpec((1, Ep), lambda i: (0, 0)),   # resident
                pl.BlockSpec((Ep, Tp), lambda i: (0, 0)),  # resident
                pl.BlockSpec((1, Tp), lambda i: (0, 0)),   # resident
            ],
            out_specs=pl.BlockSpec((TM, Tp), lambda i: (i, 0)),
        ),
        compiler_params=pltpu.CompilerParams(
            dimension_semantics=("parallel",)),
    )(x2d, w1, b1, w2, b2)


# --------------------------- parameter creation ---------------------------- #

def init_params(key, target_size, embedding_size):
    """Mirror CreateModel.init_params:
       linear_{enc,dec,out}.weight ~ N(0, sqrt(2/(out+in))), biases = 0.
       Weights are stored pre-transposed as (in, out) for the kernel (PyTorch
       nn.Linear stores (out, in) and computes x @ W^T)."""
    k_enc, k_dec, k_out = jax.random.split(key, 3)
    std_embed = math.sqrt(2.0 / (embedding_size + target_size))
    std_out = math.sqrt(2.0 / (target_size + embedding_size))
    return {
        "linear_enc_w": std_embed * jax.random.normal(
            k_enc, (target_size, embedding_size), jnp.float32),
        "linear_enc_b": jnp.zeros((embedding_size,), jnp.float32),
        "linear_dec_w": std_embed * jax.random.normal(
            k_dec, (target_size, embedding_size), jnp.float32),
        "linear_dec_b": jnp.zeros((embedding_size,), jnp.float32),
        "linear_w": std_out * jax.random.normal(
            k_out, (embedding_size, target_size), jnp.float32),
        "linear_b": jnp.zeros((target_size,), jnp.float32),
    }


def prepare_kernel_params(params, compute_dtype=jnp.bfloat16):
    """One-time (off the hot path) prep: zero-pad feature dims to a lane multiple
    so kernel stores are full unmasked 128-wide, and cast weights to bf16 for the
    MXU.  Biases stay f32 (added after f32 accumulation)."""
    w_enc = _pad_to(params["linear_enc_w"], 1, _LANE).astype(compute_dtype)      # (T, Ep)
    b_enc = _pad_to(params["linear_enc_b"].reshape(1, -1), 1, _LANE)             # (1, Ep)
    w_dec = _pad_to(params["linear_dec_w"], 1, _LANE).astype(compute_dtype)      # (T, Ep)
    b_dec = _pad_to(params["linear_dec_b"].reshape(1, -1), 1, _LANE)             # (1, Ep)
    w_out = _pad_to(_pad_to(params["linear_w"], 1, _LANE), 0, _LANE).astype(
        compute_dtype)                                                           # (Ep, Tp)
    b_out = _pad_to(params["linear_b"].reshape(1, -1), 1, _LANE)                 # (1, Tp)
    return dict(w_enc=w_enc, b_enc=b_enc, w_dec=w_dec, b_dec=b_dec,
                w_out=w_out, b_out=b_out)


# ------------------------------ forward pass ------------------------------- #

@functools.partial(jax.jit, static_argnames=("target_size", "embedding_size"))
def create_model_forward(src_seq, tgt_seq, kparams, *, target_size, embedding_size):
    """src_seq, tgt_seq: (B, S, target_size) float32.

    Reproduces the defined portion of CreateModel.forward:
      enc_input = linear_enc(src_seq).transpose(2, 1)   -> (B, E, S)
      [encoder]  TODO(synk): GConvMultiHeadAttention not provided in source
      [decoder]  TODO(synk): Decoder.forward raises in source
      output    = linear(dec_output.transpose(2, 1))    -> (B, S, target_size)
    dec_output is stood in by the decoder-side embedding linear_dec(tgt_seq); the
    former transpose + inverse-transpose pair was an identity and is removed — the
    decoder embedding and output projection are fused into one kernel.
    """
    B, S, T = src_seq.shape
    M = B * S

    # encoder embedding (gridded Pallas linear) -> slice lane padding -> NCW
    enc_emb_p = pallas_linear(src_seq.reshape(M, T),
                              kparams["w_enc"], kparams["b_enc"])        # (M, Ep) f32
    enc_emb = enc_emb_p[:, :embedding_size].reshape(B, S, embedding_size)
    enc_input = jnp.transpose(enc_emb, (0, 2, 1))                        # (B, E, S)

    # decoder path fused: (tgt @ W_dec + b_dec) @ W_out + b_out, single kernel,
    # no HBM round-trip of the (M, E) intermediate.
    out_p = pallas_linear_fused(tgt_seq.reshape(M, T),
                                kparams["w_dec"], kparams["b_dec"],
                                kparams["w_out"], kparams["b_out"])      # (M, Tp) f32
    out = out_p[:, :target_size].reshape(B, S, T)

    return out, enc_input


# ---------------------------------- main ----------------------------------- #

if __name__ == "__main__":
    # small shapes consistent with the module's forward
    B, S = 2, 8
    target_size = 16
    embedding_size = 32

    key = jax.random.PRNGKey(0)
    k_params, k_src, k_tgt = jax.random.split(key, 3)

    params = init_params(k_params, target_size, embedding_size)
    kparams = prepare_kernel_params(params)                # one-time pad + bf16 cast
    src_seq = jax.random.normal(k_src, (B, S, target_size), jnp.float32)
    tgt_seq = jax.random.normal(k_tgt, (B, S, target_size), jnp.float32)

    out, enc_input = create_model_forward(
        src_seq, tgt_seq, kparams,
        target_size=target_size, embedding_size=embedding_size)
    jax.block_until_ready(out)
    jax.block_until_ready(enc_input)

    # sanity: reference check against plain-JAX f32 linear layers
    # (kernel uses bf16 MXU inputs with f32 accumulation -> loose tolerance)
    ref_enc = jnp.transpose(src_seq @ params["linear_enc_w"] + params["linear_enc_b"],
                            (0, 2, 1))
    ref_dec = tgt_seq @ params["linear_dec_w"] + params["linear_dec_b"]
    ref_out = ref_dec @ params["linear_w"] + params["linear_b"]

    assert out.shape == (B, S, target_size)
    assert enc_input.shape == (B, embedding_size, S)
    assert jnp.allclose(enc_input, ref_enc, atol=3e-2, rtol=3e-2), "enc_input mismatch"
    assert jnp.allclose(out, ref_out, atol=3e-2, rtol=3e-2), "output mismatch"

    print("KERNEL_OK")
</pallas_src>

<mosaic_0001>
module attributes {stable_mosaic.version = 11 : i64} {
  func.func @_linear_kernel(%arg0: i32, %arg1: memref<16x16xbf16, #tpu.memory_space<vmem>>, %arg2: memref<16x128xbf16, #tpu.memory_space<vmem>>, %arg3: memref<1x128xf32, #tpu.memory_space<vmem>>, %arg4: memref<16x128xf32, #tpu.memory_space<vmem>>) attributes {dimension_semantics = [#tpu.dimension_semantics<parallel>], iteration_bounds = array<i64: 1>, scalar_prefetch = 0 : i64, scratch_operands = 0 : i64, tpu.core_type = #tpu.core_type<tc>, window_params = [{transform_indices = @transform_0, window_bounds = array<i64: 16, 16>}, {pipeline_mode = #tpu.pipeline_mode<synchronous>, transform_indices = @transform_1, window_bounds = array<i64: 16, 128>}, {pipeline_mode = #tpu.pipeline_mode<synchronous>, transform_indices = @transform_2, window_bounds = array<i64: 1, 128>}, {transform_indices = @transform_3, window_bounds = array<i64: 16, 128>}]} {
    %c0 = arith.constant 0 : index
    %c0_0 = arith.constant 0 : index
    %0 = vector.load %arg1[%c0, %c0_0] : memref<16x16xbf16, #tpu.memory_space<vmem>>, vector<16x16xbf16>
    %c0_1 = arith.constant 0 : index
    %c0_2 = arith.constant 0 : index
    %1 = vector.load %arg2[%c0_1, %c0_2] : memref<16x128xbf16, #tpu.memory_space<vmem>>, vector<16x128xbf16>
    %cst = arith.constant dense<0.000000e+00> : vector<16x128xf32>
    %2 = tpu.matmul %0, %1, %cst {dimension_numbers = #tpu.dot_dimension_numbers<[1], [0], [0], [1], [0, 0, 1, 1], [], []>} : vector<16x16xbf16>, vector<16x128xbf16>, vector<16x128xf32> -> vector<16x128xf32>
    %c0_3 = arith.constant 0 : index
    %c0_4 = arith.constant 0 : index
    %3 = vector.load %arg3[%c0_3, %c0_4] : memref<1x128xf32, #tpu.memory_space<vmem>>, vector<1x128xf32>
    %4 = vector.broadcast %3 : vector<1x128xf32> to vector<16x128xf32>
    %5 = arith.addf %2, %4 : vector<16x128xf32>
    %c0_5 = arith.constant 0 : index
    %c0_6 = arith.constant 0 : index
    %6 = vector.load %arg4[%c0_5, %c0_6] : memref<16x128xf32, #tpu.memory_space<vmem>>, vector<16x128xf32>
    tpu.vector_store %arg4[%c0_5, %c0_6], %5 {strides = array<i32>} : memref<16x128xf32, #tpu.memory_space<vmem>>, vector<16x128xf32>,
    return
  }
  func.func @transform_0(%arg0: i32) -> (i32, i32) {
    %c0_i32 = arith.constant 0 : i32
    %c0_i32_0 = arith.constant 0 : i32
    return %arg0, %c0_i32 : i32, i32
  }
  func.func @transform_1(%arg0: i32) -> (i32, i32) {
    %c0_i32 = arith.constant 0 : i32
    %c0_i32_0 = arith.constant 0 : i32
    %c0_i32_1 = arith.constant 0 : i32
    return %c0_i32, %c0_i32_0 : i32, i32
  }
  func.func @transform_2(%arg0: i32) -> (i32, i32) {
    %c0_i32 = arith.constant 0 : i32
    %c0_i32_0 = arith.constant 0 : i32
    %c0_i32_1 = arith.constant 0 : i32
    return %c0_i32, %c0_i32_0 : i32, i32
  }
  func.func @transform_3(%arg0: i32) -> (i32, i32) {
    %c0_i32 = arith.constant 0 : i32
    %c0_i32_0 = arith.constant 0 : i32
    return %arg0, %c0_i32 : i32, i32
  }
}

module attributes {stable_mosaic.version = 11 : i64} {
  func.func @kernel(%arg0: i32, %arg1: memref<16x16xbf16, #tpu.memory_space<vmem>>, %arg2: memref<16x128xbf16, #tpu.memory_space<vmem>>, %arg3: memref<1x128xf32, #tpu.memory_space<vmem>>, %arg4: memref<128x128xbf16, #tpu.memory_space<vmem>>, %arg5: memref<1x128xf32, #tpu.memory_space<vmem>>, %arg6: memref<16x128xf32, #tpu.memory_space<vmem>>) attributes {dimension_semantics = [#tpu.dimension_semantics<parallel>], iteration_bounds = array<i64: 1>, scalar_prefetch = 0 : i64, scratch_operands = 0 : i64, tpu.core_type = #tpu.core_type<tc>, window_params = [{transform_indices = @transform_0, window_bounds = array<i64: 16, 16>}, {pipeline_mode = #tpu.pipeline_mode<synchronous>, transform_indices = @transform_1, window_bounds = array<i64: 16, 128>}, {pipeline_mode = #tpu.pipeline_mode<synchronous>, transform_indices = @transform_2, window_bounds = array<i64: 1, 128>}, {pipeline_mode = #tpu.pipeline_mode<synchronous>, transform_indices = @transform_3, window_bounds = array<i64: 128, 128>}, {pipeline_mode = #tpu.pipeline_mode<synchronous>, transform_indices = @transform_4, window_bounds = array<i64: 1, 128>}, {transform_indices = @transform_5, window_bounds = array<i64: 16, 128>}]} {
    %c0 = arith.constant 0 : index
    %c0_0 = arith.constant 0 : index
    %0 = vector.load %arg1[%c0, %c0_0] : memref<16x16xbf16, #tpu.memory_space<vmem>>, vector<16x16xbf16>
    %c0_1 = arith.constant 0 : index
    %c0_2 = arith.constant 0 : index
    %1 = vector.load %arg2[%c0_1, %c0_2] : memref<16x128xbf16, #tpu.memory_space<vmem>>, vector<16x128xbf16>
    %cst = arith.constant dense<0.000000e+00> : vector<16x128xf32>
    %2 = tpu.matmul %0, %1, %cst {dimension_numbers = #tpu.dot_dimension_numbers<[1], [0], [0], [1], [0, 0, 1, 1], [], []>} : vector<16x16xbf16>, vector<16x128xbf16>, vector<16x128xf32> -> vector<16x128xf32>
    %c0_3 = arith.constant 0 : index
    %c0_4 = arith.constant 0 : index
    %3 = vector.load %arg3[%c0_3, %c0_4] : memref<1x128xf32, #tpu.memory_space<vmem>>, vector<1x128xf32>
    %4 = vector.broadcast %3 : vector<1x128xf32> to vector<16x128xf32>
    %5 = arith.addf %2, %4 : vector<16x128xf32>
    %6 = arith.truncf %5 : vector<16x128xf32> to vector<16x128xbf16>
    %c0_5 = arith.constant 0 : index
    %c0_6 = arith.constant 0 : index
    %7 = vector.load %arg4[%c0_5, %c0_6] : memref<128x128xbf16, #tpu.memory_space<vmem>>, vector<128x128xbf16>
    %cst_7 = arith.constant dense<0.000000e+00> : vector<16x128xf32>
    %8 = tpu.matmul %6, %7, %cst_7 {dimension_numbers = #tpu.dot_dimension_numbers<[1], [0], [0], [1], [0, 0, 1, 1], [], []>} : vector<16x128xbf16>, vector<128x128xbf16>, vector<16x128xf32> -> vector<16x128xf32>
    %c0_8 = arith.constant 0 : index
    %c0_9 = arith.constant 0 : index
    %9 = vector.load %arg5[%c0_8, %c0_9] : memref<1x128xf32, #tpu.memory_space<vmem>>, vector<1x128xf32>
    %10 = vector.broadcast %9 : vector<1x128xf32> to vector<16x128xf32>
    %11 = arith.addf %8, %10 : vector<16x128xf32>
    %c0_10 = arith.constant 0 : index
    %c0_11 = arith.constant 0 : index
    %12 = vector.load %arg6[%c0_10, %c0_11] : memref<16x128xf32, #tpu.memory_space<vmem>>, vector<16x128xf32>
    tpu.vector_store %arg6[%c0_10, %c0_11], %11 {strides = array<i32>} : memref<16x128xf32, #tpu.memory_space<vmem>>, vector<16x128xf32>,
    return
  }
  func.func @transform_0(%arg0: i32) -> (i32, i32) {
    %c0_i32 = arith.constant 0 : i32
    %c0_i32_0 = arith.constant 0 : i32
    return %arg0, %c0_i32 : i32, i32
  }
  func.func @transform_1(%arg0: i32) -> (i32, i32) {
    %c0_i32 = arith.constant 0 : i32
    %c0_i32_0 = arith.constant 0 : i32
    %c0_i32_1 = arith.constant 0 : i32
    return %c0_i32, %c0_i32_0 : i32, i32
  }
  func.func @transform_2(%arg0: i32) -> (i32, i32) {
    %c0_i32 = arith.constant 0 : i32
    %c0_i32_0 = arith.constant 0 : i32
    %c0_i32_1 = arith.constant 0 : i32
    return %c0_i32, %c0_i32_0 : i32, i32
  }
  func.func @transform_3(%arg0: i32) -> (i32, i32) {
    %c0_i32 = arith.constant 0 : i32
    %c0_i32_0 = arith.constant 0 : i32
    %c0_i32_1 = arith.constant 0 : i32
    return %c0_i32, %c0_i32_0 : i32, i32
  }
  func.func @transform_4(%arg0: i32) -> (i32, i32) {
    %c0_i32 = arith.constant 0 : i32
    %c0_i32_0 = arith.constant 0 : i32
    %c0_i32_1 = arith.constant 0 : i32
    return %c0_i32, %c0_i32_0 : i32, i32
  }
  func.func @transform_5(%arg0: i32) -> (i32, i32) {
    %c0_i32 = arith.constant 0 : i32
    %c0_i32_0 = arith.constant 0 : i32
    return %arg0, %c0_i32 : i32, i32
  }
}

</mosaic_0001>

<llo_original>
// kernel: create_model_forward.2
$region0: #{create_model_forward.2}
  #allocation0 [shape = 'u32[]', space=smem, size = 0x4, offset = 0x4, fixed_abs, tag = 'smem constant byte address 0x4 - core index']
  #allocation1 [shape = 'u32[144,128]{1,0:T(1,128)}', space=vmem, size = 0x12000, scoped, tag = 'internal scratch']
  %s0 = inlined_call_operand.vmem [shape: bf16[16,16], index: 0, kind: input, shape index: {}]
  %s1 = inlined_call_operand.vmem [shape: bf16[16,128], index: 1, kind: input, shape index: {}]
  %s2 = inlined_call_operand.hbm [shape: f32[1,128], index: 2, kind: input, shape index: {}]
  %s3 = inlined_call_operand.vmem [shape: f32[16,128], index: 3, kind: output, shape index: {}]
  %s4 = sld [smem:[#allocation0]]
  $region26: #{create_model_forward.2} parent=0
    _
  %s6 = ssub.s32 1, %s4
  %s7 = scalar_select 0, %s6, %s4
  $region1: #{create_model_forward.2} parent=0
    #allocation2 [shape = 'u8[512]{0}', space=vmem, size = 0x400, scoped, tag = 'input window, operand 2, single buffered']
    #allocation3 [shape = 's32[1]{0}', space=sflag, size = 0x4, scoped, tag = 'scoped memory for create_model_forward.2']
    %8 = vsyncpa [#allocation3], 0
    // Predicated region
    $region2: #{create_model_forward.2} parent=1 // pred_check
      _
    $region3: #{create_model_forward.2} parent=1 // pred_check_branch
      %10 = sbr.rel (0) target = $region5
    $region4: #{create_model_forward.2} parent=1 // pred_region
      _
    $region5: #{create_model_forward.2} parent=1 // pred_fallthru
      _
    // Predicated region
    $region6: #{create_model_forward.2} parent=1 // pred_check
      _
    $region7: #{create_model_forward.2} parent=1 // pred_check_branch
      %12 = sbr.rel (0) target = $region9
    $region8: #{create_model_forward.2} parent=1 // pred_region
      _
    $region9: #{create_model_forward.2} parent=1 // pred_fallthru
      _
    // Predicated region
    $region10: #{create_model_forward.2} parent=1 // pred_check
      _
    $region11: #{create_model_forward.2} parent=1 // pred_check_branch
      %14 = sbr.rel (0) target = $region13
    $region12: #{create_model_forward.2} parent=1 // pred_region
      %s16 = ssub.s32 16, 16
      %17 = vsyncadd [#allocation3], %s16
      %s19 = sshll.u32 [#allocation2], 4
      %s20 = int_to_ptr.vmem [resolvable:$true] %s19
      %22 = dma.hbm_to_vmem [thread:$0]  %s2, 16, %s20, [#allocation3]
    $region13: #{create_model_forward.2} parent=1 // pred_fallthru
      _
    // Predicated region
    $region14: #{create_model_forward.2} parent=1 // pred_check
      _
    $region15: #{create_model_forward.2} parent=1 // pred_check_branch
      %24 = sbr.rel (0) target = $region17
    $region16: #{create_model_forward.2} parent=1 // pred_region
      %25 = dma.done [#allocation3], 16
    $region17: #{create_model_forward.2} parent=1 // pred_fallthru
      _
    %v27 = vld [vmem:[%s0] sm:$0xf]
    %v28 = vld [vmem:[%s0 + $0x4] sm:$0xf]
    %v29 = vld [vmem:[%s1] sm:$0xf]
    %v30 = vld [vmem:[%s1 + $0x4] sm:$0xf]
    %v31 = vld [vmem:[#allocation2] sm:$0x1]
    %v33 = vlaneseq
    %v34 = vshrl.u32 %v33, 7
    %v35 = vsub.s32 0, %v34
    %v36 = vrot.slane %v31, %v35
    %v40 = vunpack.c.l.b16 %v27
    %v41 = vunpack.c.l.b16 %v28
    %v42 = vpack.c.b16 %v41, %v40
    %v45 = vunpack.c.l.b16 %v29
    %v46 = vunpack.c.l.b16 %v30
    %v47 = vpack.c.b16 %v46, %v45
    %vm49 = vcmask 130048
    %v51 = vsel %vm49, %v42, 0
    %53 = vmatprep.subr.bf16.mxu0 0
    %54 = vmatpush1.bf16.msra.mxu0 %v47
    %55 = vmatprep.subr.bf16.mxu0 0
    %56 = vmatpush1.bf16.msra.mxu0 0
    %57 = vmatprep.subr.bf16.mxu0 0
    %58 = vmatpush1.bf16.msra.mxu0 0
    %59 = vmatprep.subr.bf16.mxu0 0
    %60 = vmatpush1.bf16.msra.mxu0 0
    %61 = vmatprep.subr.bf16.mxu0 0
    %62 = vmatpush1.bf16.msra.mxu0 0
    %63 = vmatprep.subr.bf16.mxu0 0
    %64 = vmatpush1.bf16.msra.mxu0 0
    %65 = vmatprep.subr.bf16.mxu0 0
    %66 = vmatpush1.bf16.msra.mxu0 0
    %67 = vmatprep.subr.bf16.mxu0 0
    %68 = vmatpush1.bf16.msra.mxu0 0
    %69 = vmatprep.subr.bf16.mxu0 0
    %70 = vmatpush1.bf16.msra.mxu0 0
    %71 = vmatprep.subr.bf16.mxu0 0
    %72 = vmatpush1.bf16.msra.mxu0 0
    %73 = vmatprep.subr.bf16.mxu0 0
    %74 = vmatpush1.bf16.msra.mxu0 0
    %75 = vmatprep.subr.bf16.mxu0 0
    %76 = vmatpush1.bf16.msra.mxu0 0
    %77 = vmatprep.subr.bf16.mxu0 0
    %78 = vmatpush1.bf16.msra.mxu0 0
    %79 = vmatprep.subr.bf16.mxu0 0
    %80 = vmatpush1.bf16.msra.mxu0 0
    %81 = vmatprep.subr.bf16.mxu0 0
    %82 = vmatpush1.bf16.msra.mxu0 0
    %83 = vmatprep.subr.bf16.mxu0 0
    %84 = vmatpush1.bf16.msra.mxu0 0
    %85 = vmatprep.mubr.bf16.mxu0 0
    %86 = vmatmul.mubr.bf16.gmra.mrb[0].mxu0 %v51
    %v87 = vpop.f32.mrb[0].mxu0
    %v88 = vadd.f32 %v36, %v87
    %v89 = vpop.f32.mrb[0].mxu0
    %v90 = vpop.f32.mrb[0].mxu0
    %v91 = vadd.f32 %v36, %v90
    %v92 = vpop.f32.mrb[0].mxu0
    %93 = vdwg.mxu0
    %94 = vst [vmem:[%s3] sm:$0xff] %v88
    %95 = vst [vmem:[%s3 + $0x8] sm:$0xff] %v91
    // Predicated region
    $region18: #{create_model_forward.2} parent=1 // pred_check
      _
    $region19: #{create_model_forward.2} parent=1 // pred_check_branch
      %97 = sbr.rel (0) target = $region21
    $region20: #{create_model_forward.2} parent=1 // pred_region
      _
    $region21: #{create_model_forward.2} parent=1 // pred_fallthru
      _
    // Predicated region
    $region22: #{create_model_forward.2} parent=1 // pred_check
      _
    $region23: #{create_model_forward.2} parent=1 // pred_check_branch
      %99 = sbr.rel (0) target = $region25
    $region24: #{create_model_forward.2} parent=1 // pred_region
      _
    $region25: #{create_model_forward.2} parent=1 // pred_fallthru
      _
    %100 = vsyncpa [#allocation3], 1

// kernel: create_model_forward.3
$region0: #{create_model_forward.3}
  #allocation0 [shape = 'u32[]', space=smem, size = 0x4, offset = 0x4, fixed_abs, tag = 'smem constant byte address 0x4 - core index']
  #allocation1 [shape = 'u32[144,128]{1,0:T(1,128)}', space=vmem, size = 0x12000, scoped, tag = 'internal scratch']
  %s0 = inlined_call_operand.vmem [shape: bf16[16,16], index: 0, kind: input, shape index: {}]
  %s1 = inlined_call_operand.vmem [shape: bf16[16,128], index: 1, kind: input, shape index: {}]
  %s2 = inlined_call_operand.vmem [shape: f32[1,128], index: 2, kind: input, shape index: {}]
  %s3 = inlined_call_operand.vmem [shape: bf16[128,128], index: 3, kind: input, shape index: {}]
  %s4 = inlined_call_operand.vmem [shape: f32[1,128], index: 4, kind: input, shape index: {}]
  %s5 = inlined_call_operand.vmem [shape: f32[16,128], index: 5, kind: output, shape index: {}]
  %s6 = sld [smem:[#allocation0]]
  $region30: #{create_model_forward.3} parent=0
    _
  %s8 = ssub.s32 1, %s6
  %s9 = scalar_select 0, %s8, %s6
  // Predicated region
  $region2: #{create_model_forward.3} parent=0 // pred_check
    _
  $region3: #{create_model_forward.3} parent=0 // pred_check_branch
    %11 = sbr.rel (0) target = $region5
  $region4: #{create_model_forward.3} parent=0 // pred_region
    _
  $region5: #{create_model_forward.3} parent=0 // pred_fallthru
    _
  // Predicated region
  $region6: #{create_model_forward.3} parent=0 // pred_check
    _
  $region7: #{create_model_forward.3} parent=0 // pred_check_branch
    %13 = sbr.rel (0) target = $region9
  $region8: #{create_model_forward.3} parent=0 // pred_region
    _
  $region9: #{create_model_forward.3} parent=0 // pred_fallthru
    _
  // Predicated region
  $region10: #{create_model_forward.3} parent=0 // pred_check
    _
  $region11: #{create_model_forward.3} parent=0 // pred_check_branch
    %15 = sbr.rel (0) target = $region13
  $region12: #{create_model_forward.3} parent=0 // pred_region
    _
  $region13: #{create_model_forward.3} parent=0 // pred_fallthru
    _
  // Predicated region
  $region14: #{create_model_forward.3} parent=0 // pred_check
    _
  $region15: #{create_model_forward.3} parent=0 // pred_check_branch
    %17 = sbr.rel (0) target = $region17
  $region16: #{create_model_forward.3} parent=0 // pred_region
    _
  $region17: #{create_model_forward.3} parent=0 // pred_fallthru
    _
  // Predicated region
  $region18: #{create_model_forward.3} parent=0 // pred_check
    _
  $region19: #{create_model_forward.3} parent=0 // pred_check_branch
    %19 = sbr.rel (0) target = $region21
  $region20: #{create_model_forward.3} parent=0 // pred_region
    _
  $region21: #{create_model_forward.3} parent=0 // pred_fallthru
    _
  %v21 = vld [vmem:[%s0] sm:$0xf]
  %v22 = vld [vmem:[%s0 + $0x4] sm:$0xf]
  %v23 = vld [vmem:[%s1] sm:$0xf]
  %v24 = vld [vmem:[%s1 + $0x4] sm:$0xf]
  %v25 = vld [vmem:[%s2] sm:$0x1]
  %v27 = vlaneseq
  %v28 = vshrl.u32 %v27, 7
  %v29 = vsub.s32 0, %v28
  %v30 = vrot.slane %v25, %v29
  %v34 = vunpack.c.l.b16 %v21
  %v35 = vunpack.c.l.b16 %v22
  %v36 = vpack.c.b16 %v35, %v34
  %v39 = vunpack.c.l.b16 %v23
  %v40 = vunpack.c.l.b16 %v24
  %v41 = vpack.c.b16 %v40, %v39
  %vm43 = vcmask 130048
  %v45 = vsel %vm43, %v36, 0
  %47 = vmatprep.subr.bf16.mxu0 0
  %48 = vmatpush1.bf16.msra.mxu0 %v41
  %49 = vmatprep.subr.bf16.mxu0 0
  %50 = vmatpush1.bf16.msra.mxu0 0
  %51 = vmatprep.subr.bf16.mxu0 0
  %52 = vmatpush1.bf16.msra.mxu0 0
  %53 = vmatprep.subr.bf16.mxu0 0
  %54 = vmatpush1.bf16.msra.mxu0 0
  %55 = vmatprep.subr.bf16.mxu0 0
  %56 = vmatpush1.bf16.msra.mxu0 0
  %57 = vmatprep.subr.bf16.mxu0 0
  %58 = vmatpush1.bf16.msra.mxu0 0
  %59 = vmatprep.subr.bf16.mxu0 0
  %60 = vmatpush1.bf16.msra.mxu0 0
  %61 = vmatprep.subr.bf16.mxu0 0
  %62 = vmatpush1.bf16.msra.mxu0 0
  %63 = vmatprep.subr.bf16.mxu0 0
  %64 = vmatpush1.bf16.msra.mxu0 0
  %65 = vmatprep.subr.bf16.mxu0 0
  %66 = vmatpush1.bf16.msra.mxu0 0
  %67 = vmatprep.subr.bf16.mxu0 0
  %68 = vmatpush1.bf16.msra.mxu0 0
  %69 = vmatprep.subr.bf16.mxu0 0
  %70 = vmatpush1.bf16.msra.mxu0 0
  %71 = vmatprep.subr.bf16.mxu0 0
  %72 = vmatpush1.bf16.msra.mxu0 0
  %73 = vmatprep.subr.bf16.mxu0 0
  %74 = vmatpush1.bf16.msra.mxu0 0
  %75 = vmatprep.subr.bf16.mxu0 0
  %76 = vmatpush1.bf16.msra.mxu0 0
  %77 = vmatprep.subr.bf16.mxu0 0
  %78 = vmatpush1.bf16.msra.mxu0 0
  %79 = vmatprep.mubr.bf16.mxu0 0
  %80 = vmatmul.mubr.bf16.gmra.mrb[0].mxu0 %v45
  %v81 = vpop.f32.mrb[0].mxu0
  %v82 = vadd.f32 %v30, %v81
  %v83 = vpop.f32.mrb[0].mxu0
  %v84 = vpop.f32.mrb[0].mxu0
  %v85 = vadd.f32 %v30, %v84
  %v86 = vpop.f32.mrb[0].mxu0
  %87 = vdwg.mxu0
  %v88 = vpack.c.bf16 %v85, %v82
  %v89 = vld [vmem:[%s3] sm:$0xf]
  %v90 = vld [vmem:[%s3 + $0x4] sm:$0xf]
  %v91 = vld [vmem:[%s3 + $0x8] sm:$0xf]
  %v92 = vld [vmem:[%s3 + $0xc] sm:$0xf]
  %v93 = vld [vmem:[%s3 + $0x10] sm:$0xf]
  %v94 = vld [vmem:[%s3 + $0x14] sm:$0xf]
  %v95 = vld [vmem:[%s3 + $0x18] sm:$0xf]
  %v96 = vld [vmem:[%s3 + $0x1c] sm:$0xf]
  %v97 = vld [vmem:[%s3 + $0x20] sm:$0xf]
  %v98 = vld [vmem:[%s3 + $0x24] sm:$0xf]
  %v99 = vld [vmem:[%s3 + $0x28] sm:$0xf]
  %v100 = vld [vmem:[%s3 + $0x2c] sm:$0xf]
  %v101 = vld [vmem:[%s3 + $0x30] sm:$0xf]
  %v102 = vld [vmem:[%s3 + $0x34] sm:$0xf]
  %v103 = vld [vmem:[%s3 + $0x38] sm:$0xf]
  %v104 = vld [vmem:[%s3 + $0x3c] sm:$0xf]
  %v105 = vld [vmem:[%s4] sm:$0x1]
  %v107 = vlaneseq
  %v108 = vshrl.u32 %v107, 7
  %v109 = vsub.s32 0, %v108
  %v110 = vrot.slane %v105, %v109
  %v128 = vunpack.c.l.b16 %v89
  %v129 = vunpack.c.l.b16 %v90
  %v130 = vunpack.c.l.b16 %v91
  %v131 = vunpack.c.l.b16 %v92
  %v132 = vunpack.c.l.b16 %v93
  %v133 = vunpack.c.l.b16 %v94
  %v134 = vunpack.c.l.b16 %v95
  %v135 = vunpack.c.l.b16 %v96
  %v136 = vunpack.c.l.b16 %v97
  %v137 = vunpack.c.l.b16 %v98
  %v138 = vunpack.c.l.b16 %v99
  %v139 = vunpack.c.l.b16 %v100
  %v140 = vunpack.c.l.b16 %v101
  %v141 = vunpack.c.l.b16 %v102
  %v142 = vunpack.c.l.b16 %v103
  %v143 = vunpack.c.l.b16 %v104
  %v144 = vpack.c.b16 %v129, %v128
  %v145 = vpack.c.b16 %v131, %v130
  %v146 = vpack.c.b16 %v133, %v132
  %v147 = vpack.c.b16 %v135, %v134
  %v148 = vpack.c.b16 %v137, %v136
  %v149 = vpack.c.b16 %v139, %v138
  %v150 = vpack.c.b16 %v141, %v140
  %v151 = vpack.c.b16 %v143, %v142
  %160 = vmatprep.subr.bf16.mxu0 0
  %161 = vmatpush1.bf16.msra.mxu0 %v144
  %162 = vmatprep.subr.bf16.mxu0 0
  %163 = vmatpush1.bf16.msra.mxu0 %v145
  %164 = vmatprep.subr.bf16.mxu0 0
  %165 = vmatpush1.bf16.msra.mxu0 %v146
  %166 = vmatprep.subr.bf16.mxu0 0
  %167 = vmatpush1.bf16.msra.mxu0 %v147
  %168 = vmatprep.subr.bf16.mxu0 0
  %169 = vmatpush1.bf16.msra.mxu0 %v148
  %170 = vmatprep.subr.bf16.mxu0 0
  %171 = vmatpush1.bf16.msra.mxu0 %v149
  %172 = vmatprep.subr.bf16.mxu0 0
  %173 = vmatpush1.bf16.msra.mxu0 %v150
  %174 = vmatprep.subr.bf16.mxu0 0
  %175 = vmatpush1.bf16.msra.mxu0 %v151
  %176 = vmatprep.subr.bf16.mxu0 0
  %177 = vmatpush1.bf16.msra.mxu0 0
  %178 = vmatprep.subr.bf16.mxu0 0
  %179 = vmatpush1.bf16.msra.mxu0 0
  %180 = vmatprep.subr.bf16.mxu0 0
  %181 = vmatpush1.bf16.msra.mxu0 0
  %182 = vmatprep.subr.bf16.mxu0 0
  %183 = vmatpush1.bf16.msra.mxu0 0
  %184 = vmatprep.subr.bf16.mxu0 0
  %185 = vmatpush1.bf16.msra.mxu0 0
  %186 = vmatprep.subr.bf16.mxu0 0
  %187 = vmatpush1.bf16.msra.mxu0 0
  %188 = vmatprep.subr.bf16.mxu0 0
  %189 = vmatpush1.bf16.msra.mxu0 0
  %190 = vmatprep.subr.bf16.mxu0 0
  %191 = vmatpush1.bf16.msra.mxu0 0
  %192 = vmatprep.mubr.bf16.mxu0 0
  %193 = vmatmul.mubr.bf16.gmra.mrb[0].mxu0 %v88
  %v194 = vpop.f32.mrb[0].mxu0
  %v195 = vadd.f32 %v110, %v194
  %v196 = vpop.f32.mrb[0].mxu0
  %v197 = vpop.f32.mrb[0].mxu0
  %v198 = vadd.f32 %v110, %v197
  %v199 = vpop.f32.mrb[0].mxu0
  %200 = vdwg.mxu0
  %201 = vst [vmem:[%s5] sm:$0xff] %v195
  %202 = vst [vmem:[%s5 + $0x8] sm:$0xff] %v198
  // Predicated region
  $region22: #{create_model_forward.3} parent=0 // pred_check
    _
  $region23: #{create_model_forward.3} parent=0 // pred_check_branch
    %204 = sbr.rel (0) target = $region25
  $region24: #{create_model_forward.3} parent=0 // pred_region
    _
  $region25: #{create_model_forward.3} parent=0 // pred_fallthru
    _
  // Predicated region
  $region26: #{create_model_forward.3} parent=0 // pred_check
    _
  $region27: #{create_model_forward.3} parent=0 // pred_check_branch
    %206 = sbr.rel (0) target = $region29
  $region28: #{create_model_forward.3} parent=0 // pred_region
    _
  $region29: #{create_model_forward.3} parent=0 // pred_fallthru
    _

</llo_original>
